<compile_context>
chip_gen: v6e
topology: v6e:2x2x1
jax: 0.10.0
libtpu: 0.0.40
codegen_flags: <defaults>
</compile_context>

<pallas_src>
import jax
import jax.numpy as jnp
from jax.experimental import pallas as pl
from jax.experimental.pallas import tpu as pltpu


def _round_up(x: int, m: int) -> int:
    return ((x + m - 1) // m) * m


def _make_fused_mlp_kernel(num_layers: int):
    """Kernel args: x_ref, w0, b0, w1, b1, ..., o_ref.  y_l = relu(h @ W_l + b_l)."""

    def kernel(x_ref, *refs):
        o_ref = refs[2 * num_layers]
        h = x_ref[...]                                        # [TB, K0p] bf16
        for l in range(num_layers):
            w_ref = refs[2 * l]
            b_ref = refs[2 * l + 1]
            y = jnp.dot(h, w_ref[...],                        # MXU, f32 accum
                        preferred_element_type=jnp.float32)
            y = jnp.maximum(y + b_ref[...], 0.0)              # f32 bias + ReLU
            if l + 1 < num_layers:
                h = y.astype(jnp.bfloat16)                    # next MXU operand
            else:
                o_ref[...] = y.astype(o_ref.dtype)            # lane-dense store

    return kernel


def fused_mlp(x: jax.Array, padded_params, out_features: int,
              *, max_batch_tile: int = 512) -> jax.Array:
    """Fused MLP forward.

    x: [B, in_features] float32.
    padded_params: list of (W_pad bf16 [Kp, Np], b_pad f32 [1, Np]) with Kp/Np
                   padded to multiples of 128 (zero-padded).
    Returns: [B, out_features] float32.
    """
    B, K = x.shape
    num_layers = len(padded_params)
    K0p = padded_params[0][0].shape[0]
    Np_last = padded_params[-1][0].shape[1]

    # ---- batch tiling: pad batch to a multiple of the tile ----
    TB = min(max_batch_tile, _round_up(B, 8))
    grid_b = pl.cdiv(_round_up(B, 8), TB)
    Bp = grid_b * TB

    # Pad + cast the input once (zero rows/columns contribute nothing).
    xp = jnp.zeros((Bp, K0p), jnp.bfloat16).at[:B, :K].set(x.astype(jnp.bfloat16))

    # ---- specs ----
    in_specs = [pl.BlockSpec((TB, K0p), lambda i: (i, 0))]
    flat_params = []
    flops = 0
    weight_bytes = 0
    for (w_pad, b_pad) in padded_params:
        Kp, Np = w_pad.shape
        in_specs.append(pl.BlockSpec((Kp, Np), lambda i: (0, 0)))  # VMEM-resident
        in_specs.append(pl.BlockSpec((1, Np), lambda i: (0, 0)))
        flat_params += [w_pad, b_pad]
        flops += 2 * Bp * Kp * Np
        weight_bytes += w_pad.size * w_pad.dtype.itemsize + b_pad.size * 4

    out_specs = pl.BlockSpec((TB, Np_last), lambda i: (i, 0))

    # ---- conservative VMEM budget (keeps the 2-deep pipeline on v7x's 64 MiB) ----
    max_np = max(w.shape[1] for w, _ in padded_params)
    vmem_needed = (2 * TB * K0p * 2          # double-buffered input tile (bf16)
                   + 2 * TB * Np_last * 4    # double-buffered output tile (f32)
                   + 2 * weight_bytes        # weights/biases (assume 2 buffers)
                   + 4 * TB * max_np)        # live intermediate activation
    vmem_limit = min(64 * 1024 * 1024, max(32 * 1024 * 1024, 2 * vmem_needed))

    cost = pl.CostEstimate(
        flops=flops,
        transcendentals=0,
        bytes_accessed=xp.size * 2 + weight_bytes + Bp * Np_last * 4,
    )

    out_padded = pl.pallas_call(
        _make_fused_mlp_kernel(num_layers),
        out_shape=jax.ShapeDtypeStruct((Bp, Np_last), jnp.float32),
        grid_spec=pl.GridSpec(grid=(grid_b,), in_specs=in_specs, out_specs=out_specs),
        compiler_params=pltpu.CompilerParams(
            dimension_semantics=("parallel",),   # batch tiles are independent
            vmem_limit_bytes=vmem_limit,
        ),
        cost_estimate=cost,
    )(xp, *flat_params)

    return out_padded[:B, :out_features]


class DenseArchPallas:
    """JAX/Pallas equivalent of torchrec DenseArch (MLP, ReLU on every layer)."""

    def __init__(self, in_features: int, layer_sizes, key: jax.Array):
        self.layer_sizes = list(layer_sizes)
        self.params = []          # unpadded f32 params (reference semantics)
        self.padded_params = []   # 128-padded bf16 weights / f32 biases (kernel)
        fan_in = in_features
        for out_features in layer_sizes:
            key, wk, bk = jax.random.split(key, 3)
            bound = 1.0 / (fan_in ** 0.5)   # torch.nn.Linear default init bound
            w = jax.random.uniform(wk, (fan_in, out_features), jnp.float32, -bound, bound)
            b = jax.random.uniform(bk, (1, out_features), jnp.float32, -bound, bound)
            self.params.append((w, b))

            Kp = _round_up(fan_in, 128)
            Np = _round_up(out_features, 128)
            w_pad = (jnp.zeros((Kp, Np), jnp.bfloat16)
                     .at[:fan_in, :out_features].set(w.astype(jnp.bfloat16)))
            b_pad = (jnp.zeros((1, Np), jnp.float32)
                     .at[:, :out_features].set(b))
            self.padded_params.append((w_pad, b_pad))
            fan_in = out_features

    def __call__(self, features: jax.Array) -> jax.Array:
        return fused_mlp(features, self.padded_params, self.layer_sizes[-1])


if __name__ == "__main__":
    key = jax.random.PRNGKey(0)
    key, xk, pk = jax.random.split(key, 3)

    B = 16
    IN_FEATURES = 13          # DLRM-style dense feature count
    LAYER_SIZES = [64, 16]    # output is B x 16

    features = jax.random.uniform(xk, (B, IN_FEATURES), jnp.float32)

    model = DenseArchPallas(IN_FEATURES, LAYER_SIZES, pk)
    out = jax.block_until_ready(model(features))

    # Pure-JAX f32 reference (same math; kernel uses bf16 MXU operands).
    ref = features
    for w, b in model.params:
        ref = jnp.maximum(ref @ w + b, 0.0)

    assert out.shape == (B, LAYER_SIZES[-1])
    assert jnp.allclose(out, ref, atol=2e-2, rtol=2e-2), float(jnp.max(jnp.abs(out - ref)))

    print("KERNEL_OK")
</pallas_src>

<mosaic_0001>
module attributes {stable_mosaic.version = 11 : i64} {
  func.func @kernel(%arg0: i32, %arg1: memref<16x128xbf16, #tpu.memory_space<vmem>>, %arg2: memref<128x128xbf16, #tpu.memory_space<vmem>>, %arg3: memref<1x128xf32, #tpu.memory_space<vmem>>, %arg4: memref<128x128xbf16, #tpu.memory_space<vmem>>, %arg5: memref<1x128xf32, #tpu.memory_space<vmem>>, %arg6: memref<16x128xf32, #tpu.memory_space<vmem>>) attributes {dimension_semantics = [#tpu.dimension_semantics<parallel>], iteration_bounds = array<i64: 1>, scalar_prefetch = 0 : i64, scratch_operands = 0 : i64, tpu.core_type = #tpu.core_type<tc>, window_params = [{transform_indices = @transform_0, window_bounds = array<i64: 16, 128>}, {pipeline_mode = #tpu.pipeline_mode<synchronous>, transform_indices = @transform_1, window_bounds = array<i64: 128, 128>}, {pipeline_mode = #tpu.pipeline_mode<synchronous>, transform_indices = @transform_2, window_bounds = array<i64: 1, 128>}, {pipeline_mode = #tpu.pipeline_mode<synchronous>, transform_indices = @transform_3, window_bounds = array<i64: 128, 128>}, {pipeline_mode = #tpu.pipeline_mode<synchronous>, transform_indices = @transform_4, window_bounds = array<i64: 1, 128>}, {transform_indices = @transform_5, window_bounds = array<i64: 16, 128>}]} {
    %c0 = arith.constant 0 : index
    %c0_0 = arith.constant 0 : index
    %0 = vector.load %arg1[%c0, %c0_0] : memref<16x128xbf16, #tpu.memory_space<vmem>>, vector<16x128xbf16>
    %c0_1 = arith.constant 0 : index
    %c0_2 = arith.constant 0 : index
    %1 = vector.load %arg2[%c0_1, %c0_2] : memref<128x128xbf16, #tpu.memory_space<vmem>>, vector<128x128xbf16>
    %cst = arith.constant dense<0.000000e+00> : vector<16x128xf32>
    %2 = tpu.matmul %0, %1, %cst {dimension_numbers = #tpu.dot_dimension_numbers<[1], [0], [0], [1], [0, 0, 1, 1], [], []>} : vector<16x128xbf16>, vector<128x128xbf16>, vector<16x128xf32> -> vector<16x128xf32>
    %c0_3 = arith.constant 0 : index
    %c0_4 = arith.constant 0 : index
    %3 = vector.load %arg3[%c0_3, %c0_4] : memref<1x128xf32, #tpu.memory_space<vmem>>, vector<1x128xf32>
    %4 = vector.broadcast %3 : vector<1x128xf32> to vector<16x128xf32>
    %5 = arith.addf %2, %4 : vector<16x128xf32>
    %cst_5 = arith.constant 0.000000e+00 : f32
    %6 = vector.broadcast %cst_5 : f32 to vector<16x128xf32>
    %7 = arith.maximumf %5, %6 : vector<16x128xf32>
    %8 = arith.truncf %7 : vector<16x128xf32> to vector<16x128xbf16>
    %c0_6 = arith.constant 0 : index
    %c0_7 = arith.constant 0 : index
    %9 = vector.load %arg4[%c0_6, %c0_7] : memref<128x128xbf16, #tpu.memory_space<vmem>>, vector<128x128xbf16>
    %cst_8 = arith.constant dense<0.000000e+00> : vector<16x128xf32>
    %10 = tpu.matmul %8, %9, %cst_8 {dimension_numbers = #tpu.dot_dimension_numbers<[1], [0], [0], [1], [0, 0, 1, 1], [], []>} : vector<16x128xbf16>, vector<128x128xbf16>, vector<16x128xf32> -> vector<16x128xf32>
    %c0_9 = arith.constant 0 : index
    %c0_10 = arith.constant 0 : index
    %11 = vector.load %arg5[%c0_9, %c0_10] : memref<1x128xf32, #tpu.memory_space<vmem>>, vector<1x128xf32>
    %12 = vector.broadcast %11 : vector<1x128xf32> to vector<16x128xf32>
    %13 = arith.addf %10, %12 : vector<16x128xf32>
    %cst_11 = arith.constant 0.000000e+00 : f32
    %14 = vector.broadcast %cst_11 : f32 to vector<16x128xf32>
    %15 = arith.maximumf %13, %14 : vector<16x128xf32>
    %c0_12 = arith.constant 0 : index
    %c0_13 = arith.constant 0 : index
    %16 = vector.load %arg6[%c0_12, %c0_13] : memref<16x128xf32, #tpu.memory_space<vmem>>, vector<16x128xf32>
    tpu.vector_store %arg6[%c0_12, %c0_13], %15 {strides = array<i32>} : memref<16x128xf32, #tpu.memory_space<vmem>>, vector<16x128xf32>,
    return
  }
  func.func @transform_0(%arg0: i32) -> (i32, i32) {
    %c0_i32 = arith.constant 0 : i32
    %c0_i32_0 = arith.constant 0 : i32
    return %arg0, %c0_i32 : i32, i32
  }
  func.func @transform_1(%arg0: i32) -> (i32, i32) {
    %c0_i32 = arith.constant 0 : i32
    %c0_i32_0 = arith.constant 0 : i32
    %c0_i32_1 = arith.constant 0 : i32
    return %c0_i32, %c0_i32_0 : i32, i32
  }
  func.func @transform_2(%arg0: i32) -> (i32, i32) {
    %c0_i32 = arith.constant 0 : i32
    %c0_i32_0 = arith.constant 0 : i32
    %c0_i32_1 = arith.constant 0 : i32
    return %c0_i32, %c0_i32_0 : i32, i32
  }
  func.func @transform_3(%arg0: i32) -> (i32, i32) {
    %c0_i32 = arith.constant 0 : i32
    %c0_i32_0 = arith.constant 0 : i32
    %c0_i32_1 = arith.constant 0 : i32
    return %c0_i32, %c0_i32_0 : i32, i32
  }
  func.func @transform_4(%arg0: i32) -> (i32, i32) {
    %c0_i32 = arith.constant 0 : i32
    %c0_i32_0 = arith.constant 0 : i32
    %c0_i32_1 = arith.constant 0 : i32
    return %c0_i32, %c0_i32_0 : i32, i32
  }
  func.func @transform_5(%arg0: i32) -> (i32, i32) {
    %c0_i32 = arith.constant 0 : i32
    %c0_i32_0 = arith.constant 0 : i32
    return %arg0, %c0_i32 : i32, i32
  }
}

</mosaic_0001>

<llo_original>
// kernel: tpu_custom_call.1
$region0: #{tpu_custom_call.1}
  #allocation0 [shape = 'u32[]', space=smem, size = 0x4, offset = 0x4, fixed_abs, tag = 'smem constant byte address 0x4 - core index']
  #allocation1 [shape = 'u32[144,128]{1,0:T(1,128)}', space=vmem, size = 0x12000, scoped, tag = 'internal scratch']
  %s0 = inlined_call_operand.hbm [shape: bf16[16,128], index: 0, kind: input, shape index: {}]
  %s1 = inlined_call_operand.hbm [shape: bf16[128,128], index: 1, kind: input, shape index: {}]
  %s2 = inlined_call_operand.vmem [shape: f32[1,128], index: 2, kind: input, shape index: {}]
  %s3 = inlined_call_operand.hbm [shape: bf16[128,128], index: 3, kind: input, shape index: {}]
  %s4 = inlined_call_operand.vmem [shape: f32[1,128], index: 4, kind: input, shape index: {}]
  %s5 = inlined_call_operand.hbm [shape: f32[16,128], index: 5, kind: output, shape index: {}]
  %s6 = sld [smem:[#allocation0]]
  $region42: #{tpu_custom_call.1} parent=0
    _
  %s8 = ssub.s32 1, %s6
  %s9 = scalar_select 0, %s8, %s6
  $region1: #{tpu_custom_call.1} parent=0
    #allocation2 [shape = 'u8[4096]{0}', space=vmem, size = 0x1000, scoped, tag = 'input window, operand 0, single buffered']
    #allocation3 [shape = 's32[1]{0}', space=sflag, size = 0x4, scoped, tag = 'scoped memory for tpu_custom_call.1']
    #allocation4 [shape = 's32[1]{0}', space=sflag, size = 0x4, scoped, tag = 'scoped memory for tpu_custom_call.1']
    #allocation5 [shape = 'u8[32768]{0}', space=vmem, size = 0x8000, scoped, tag = 'input window, operand 1, single buffered']
    #allocation6 [shape = 's32[1]{0}', space=sflag, size = 0x4, scoped, tag = 'scoped memory for tpu_custom_call.1']
    #allocation7 [shape = 'u8[32768]{0}', space=vmem, size = 0x8000, scoped, tag = 'input window, operand 3, single buffered']
    #allocation8 [shape = 'u8[8192]{0}', space=vmem, size = 0x2000, scoped, tag = 'output window, operand 0, single buffered']
    %10 = vsyncpa [#allocation3], 0
    %11 = vsyncpa [#allocation6], 0
    %12 = vsyncpa [#allocation4], 0
    // Predicated region
    $region2: #{tpu_custom_call.1} parent=1 // pred_check
      _
    $region3: #{tpu_custom_call.1} parent=1 // pred_check_branch
      %14 = sbr.rel (0) target = $region5
    $region4: #{tpu_custom_call.1} parent=1 // pred_region
      %s16 = ssub.s32 128, 128
      %17 = vsyncadd [#allocation3], %s16
      %s18 = sshll.u32 [#allocation2], 4
      %s19 = int_to_ptr.vmem [resolvable:$true] %s18
      %24 = dma.hbm_to_vmem [thread:$0]  %s0, 128, %s19, [#allocation3], 64, 64, 4
    $region5: #{tpu_custom_call.1} parent=1 // pred_fallthru
      _
    // Predicated region
    $region6: #{tpu_custom_call.1} parent=1 // pred_check
      _
    $region7: #{tpu_custom_call.1} parent=1 // pred_check_branch
      %26 = sbr.rel (0) target = $region9
    $region8: #{tpu_custom_call.1} parent=1 // pred_region
      %s28 = ssub.s32 1024, 1024
      %29 = vsyncadd [#allocation6], %s28
      %s30 = sshll.u32 [#allocation5], 4
      %s31 = int_to_ptr.vmem [resolvable:$true] %s30
      %36 = dma.hbm_to_vmem [thread:$0]  %s1, 1024, %s31, [#allocation6], 64, 64, 4
    $region9: #{tpu_custom_call.1} parent=1 // pred_fallthru
      _
    // Predicated region
    $region10: #{tpu_custom_call.1} parent=1 // pred_check
      _
    $region11: #{tpu_custom_call.1} parent=1 // pred_check_branch
      %38 = sbr.rel (0) target = $region13
    $region12: #{tpu_custom_call.1} parent=1 // pred_region
      _
    $region13: #{tpu_custom_call.1} parent=1 // pred_fallthru
      _
    // Predicated region
    $region14: #{tpu_custom_call.1} parent=1 // pred_check
      _
    $region15: #{tpu_custom_call.1} parent=1 // pred_check_branch
      %40 = sbr.rel (0) target = $region17
    $region16: #{tpu_custom_call.1} parent=1 // pred_region
      %s42 = ssub.s32 1024, 1024
      %43 = vsyncadd [#allocation6], %s42
      %s44 = sshll.u32 [#allocation7], 4
      %s45 = int_to_ptr.vmem [resolvable:$true] %s44
      %50 = dma.hbm_to_vmem [thread:$0]  %s3, 1024, %s45, [#allocation6], 64, 64, 4
    $region17: #{tpu_custom_call.1} parent=1 // pred_fallthru
      _
    // Predicated region
    $region18: #{tpu_custom_call.1} parent=1 // pred_check
      _
    $region19: #{tpu_custom_call.1} parent=1 // pred_check_branch
      %52 = sbr.rel (0) target = $region21
    $region20: #{tpu_custom_call.1} parent=1 // pred_region
      _
    $region21: #{tpu_custom_call.1} parent=1 // pred_fallthru
      _
    // Predicated region
    $region22: #{tpu_custom_call.1} parent=1 // pred_check
      _
    $region23: #{tpu_custom_call.1} parent=1 // pred_check_branch
      %54 = sbr.rel (0) target = $region25
    $region24: #{tpu_custom_call.1} parent=1 // pred_region
      %55 = dma.done [#allocation3], 128
    $region25: #{tpu_custom_call.1} parent=1 // pred_fallthru
      _
    // Predicated region
    $region26: #{tpu_custom_call.1} parent=1 // pred_check
      _
    $region27: #{tpu_custom_call.1} parent=1 // pred_check_branch
      %57 = sbr.rel (0) target = $region29
    $region28: #{tpu_custom_call.1} parent=1 // pred_region
      %58 = dma.done [#allocation6], 1024
    $region29: #{tpu_custom_call.1} parent=1 // pred_fallthru
      _
    // Predicated region
    $region30: #{tpu_custom_call.1} parent=1 // pred_check
      _
    $region31: #{tpu_custom_call.1} parent=1 // pred_check_branch
      %60 = sbr.rel (0) target = $region33
    $region32: #{tpu_custom_call.1} parent=1 // pred_region
      %61 = dma.done [#allocation6], 1024
    $region33: #{tpu_custom_call.1} parent=1 // pred_fallthru
      _
    %v63 = vld [vmem:[#allocation2] sm:$0xf]
    %v64 = vld [vmem:[#allocation2 + $0x4] sm:$0xf]
    %v65 = vld [vmem:[#allocation5] sm:$0xf]
    %v66 = vld [vmem:[#allocation5 + $0x4] sm:$0xf]
    %v67 = vld [vmem:[#allocation5 + $0x8] sm:$0xf]
    %v68 = vld [vmem:[#allocation5 + $0xc] sm:$0xf]
    %v69 = vld [vmem:[#allocation5 + $0x10] sm:$0xf]
    %v70 = vld [vmem:[#allocation5 + $0x14] sm:$0xf]
    %v71 = vld [vmem:[#allocation5 + $0x18] sm:$0xf]
    %v72 = vld [vmem:[#allocation5 + $0x1c] sm:$0xf]
    %v73 = vld [vmem:[#allocation5 + $0x20] sm:$0xf]
    %v74 = vld [vmem:[#allocation5 + $0x24] sm:$0xf]
    %v75 = vld [vmem:[#allocation5 + $0x28] sm:$0xf]
    %v76 = vld [vmem:[#allocation5 + $0x2c] sm:$0xf]
    %v77 = vld [vmem:[#allocation5 + $0x30] sm:$0xf]
    %v78 = vld [vmem:[#allocation5 + $0x34] sm:$0xf]
    %v79 = vld [vmem:[#allocation5 + $0x38] sm:$0xf]
    %v80 = vld [vmem:[#allocation5 + $0x3c] sm:$0xf]
    %v81 = vld [vmem:[%s2] sm:$0x1]
    %v83 = vlaneseq
    %v84 = vshrl.u32 %v83, 7
    %v85 = vsub.s32 0, %v84
    %v86 = vrot.slane %v81, %v85
    %v90 = vunpack.c.l.b16 %v63
    %v91 = vunpack.c.l.b16 %v64
    %v92 = vpack.c.b16 %v91, %v90
    %v110 = vunpack.c.l.b16 %v65
    %v111 = vunpack.c.l.b16 %v66
    %v112 = vunpack.c.l.b16 %v67
    %v113 = vunpack.c.l.b16 %v68
    %v114 = vunpack.c.l.b16 %v69
    %v115 = vunpack.c.l.b16 %v70
    %v116 = vunpack.c.l.b16 %v71
    %v117 = vunpack.c.l.b16 %v72
    %v118 = vunpack.c.l.b16 %v73
    %v119 = vunpack.c.l.b16 %v74
    %v120 = vunpack.c.l.b16 %v75
    %v121 = vunpack.c.l.b16 %v76
    %v122 = vunpack.c.l.b16 %v77
    %v123 = vunpack.c.l.b16 %v78
    %v124 = vunpack.c.l.b16 %v79
    %v125 = vunpack.c.l.b16 %v80
    %v126 = vpack.c.b16 %v111, %v110
    %v127 = vpack.c.b16 %v113, %v112
    %v128 = vpack.c.b16 %v115, %v114
    %v129 = vpack.c.b16 %v117, %v116
    %v130 = vpack.c.b16 %v119, %v118
    %v131 = vpack.c.b16 %v121, %v120
    %v132 = vpack.c.b16 %v123, %v122
    %v133 = vpack.c.b16 %v125, %v124
    %142 = vmatprep.subr.bf16.mxu0 0
    %143 = vmatpush1.bf16.msra.mxu0 %v133
    %144 = vmatprep.subr.bf16.mxu0 0
    %145 = vmatpush1.bf16.msra.mxu0 %v132
    %146 = vmatprep.subr.bf16.mxu0 0
    %147 = vmatpush1.bf16.msra.mxu0 %v131
    %148 = vmatprep.subr.bf16.mxu0 0
    %149 = vmatpush1.bf16.msra.mxu0 %v130
    %150 = vmatprep.subr.bf16.mxu0 0
    %151 = vmatpush1.bf16.msra.mxu0 %v129
    %152 = vmatprep.subr.bf16.mxu0 0
    %153 = vmatpush1.bf16.msra.mxu0 %v128
    %154 = vmatprep.subr.bf16.mxu0 0
    %155 = vmatpush1.bf16.msra.mxu0 %v127
    %156 = vmatprep.subr.bf16.mxu0 0
    %157 = vmatpush1.bf16.msra.mxu0 %v126
    %158 = vmatprep.subr.bf16.mxu0 0
    %159 = vmatpush2.bf16.msra.mxu0 0
    %160 = vmatprep.subr.bf16.mxu0 0
    %161 = vmatpush2.bf16.msra.mxu0 0
    %162 = vmatprep.subr.bf16.mxu0 0
    %163 = vmatpush2.bf16.msra.mxu0 0
    %164 = vmatprep.subr.bf16.mxu0 0
    %165 = vmatpush2.bf16.msra.mxu0 0
    %166 = vmatprep.subr.bf16.mxu0 0
    %167 = vmatpush2.bf16.msra.mxu0 0
    %168 = vmatprep.subr.bf16.mxu0 0
    %169 = vmatpush2.bf16.msra.mxu0 0
    %170 = vmatprep.subr.bf16.mxu0 0
    %171 = vmatpush2.bf16.msra.mxu0 0
    %172 = vmatprep.subr.bf16.mxu0 0
    %173 = vmatpush2.bf16.msra.mxu0 0
    %174 = vmatprep.mubr.bf16.mxu0 0
    %175 = vmatmul.mubr.bf16.gmra.mxu0 %v92
    %v176 = vpop.f32.mrf.mxu0
    %v177 = vadd.f32 %v86, %v176
    %v178 = vpop.f32.mrf.mxu0
    %v179 = vpop.f32.mrf.mxu0
    %v180 = vadd.f32 %v86, %v179
    %v181 = vpop.f32.mrf.mxu0
    %182 = vdwg.mxu0
    %v183 = vmax.f32 %v177, 0.0
    %v184 = vmax.f32 %v180, 0.0
    %v185 = vpack.c.bf16 %v184, %v183
    %v186 = vld [vmem:[#allocation7] sm:$0xf]
    %v187 = vld [vmem:[#allocation7 + $0x4] sm:$0xf]
    %v188 = vld [vmem:[#allocation7 + $0x8] sm:$0xf]
    %v189 = vld [vmem:[#allocation7 + $0xc] sm:$0xf]
    %v190 = vld [vmem:[#allocation7 + $0x10] sm:$0xf]
    %v191 = vld [vmem:[#allocation7 + $0x14] sm:$0xf]
    %v192 = vld [vmem:[#allocation7 + $0x18] sm:$0xf]
    %v193 = vld [vmem:[#allocation7 + $0x1c] sm:$0xf]
    %v194 = vld [vmem:[#allocation7 + $0x20] sm:$0xf]
    %v195 = vld [vmem:[#allocation7 + $0x24] sm:$0xf]
    %v196 = vld [vmem:[#allocation7 + $0x28] sm:$0xf]
    %v197 = vld [vmem:[#allocation7 + $0x2c] sm:$0xf]
    %v198 = vld [vmem:[#allocation7 + $0x30] sm:$0xf]
    %v199 = vld [vmem:[#allocation7 + $0x34] sm:$0xf]
    %v200 = vld [vmem:[#allocation7 + $0x38] sm:$0xf]
    %v201 = vld [vmem:[#allocation7 + $0x3c] sm:$0xf]
    %v202 = vld [vmem:[%s4] sm:$0x1]
    %v204 = vlaneseq
    %v205 = vshrl.u32 %v204, 7
    %v206 = vsub.s32 0, %v205
    %v207 = vrot.slane %v202, %v206
    %v225 = vunpack.c.l.b16 %v186
    %v226 = vunpack.c.l.b16 %v187
    %v227 = vunpack.c.l.b16 %v188
    %v228 = vunpack.c.l.b16 %v189
    %v229 = vunpack.c.l.b16 %v190
    %v230 = vunpack.c.l.b16 %v191
    %v231 = vunpack.c.l.b16 %v192
    %v232 = vunpack.c.l.b16 %v193
    %v233 = vunpack.c.l.b16 %v194
    %v234 = vunpack.c.l.b16 %v195
    %v235 = vunpack.c.l.b16 %v196
    %v236 = vunpack.c.l.b16 %v197
    %v237 = vunpack.c.l.b16 %v198
    %v238 = vunpack.c.l.b16 %v199
    %v239 = vunpack.c.l.b16 %v200
    %v240 = vunpack.c.l.b16 %v201
    %v241 = vpack.c.b16 %v226, %v225
    %v242 = vpack.c.b16 %v228, %v227
    %v243 = vpack.c.b16 %v230, %v229
    %v244 = vpack.c.b16 %v232, %v231
    %v245 = vpack.c.b16 %v234, %v233
    %v246 = vpack.c.b16 %v236, %v235
    %v247 = vpack.c.b16 %v238, %v237
    %v248 = vpack.c.b16 %v240, %v239
    %257 = vmatprep.subr.bf16.mxu0 0
    %258 = vmatpush1.bf16.msra.mxu0 %v248
    %259 = vmatprep.subr.bf16.mxu0 0
    %260 = vmatpush1.bf16.msra.mxu0 %v247
    %261 = vmatprep.subr.bf16.mxu0 0
    %262 = vmatpush1.bf16.msra.mxu0 %v246
    %263 = vmatprep.subr.bf16.mxu0 0
    %264 = vmatpush1.bf16.msra.mxu0 %v245
    %265 = vmatprep.subr.bf16.mxu0 0
    %266 = vmatpush1.bf16.msra.mxu0 %v244
    %267 = vmatprep.subr.bf16.mxu0 0
    %268 = vmatpush1.bf16.msra.mxu0 %v243
    %269 = vmatprep.subr.bf16.mxu0 0
    %270 = vmatpush1.bf16.msra.mxu0 %v242
    %271 = vmatprep.subr.bf16.mxu0 0
    %272 = vmatpush1.bf16.msra.mxu0 %v241
    %273 = vmatprep.subr.bf16.mxu0 0
    %274 = vmatpush2.bf16.msra.mxu0 0
    %275 = vmatprep.subr.bf16.mxu0 0
    %276 = vmatpush2.bf16.msra.mxu0 0
    %277 = vmatprep.subr.bf16.mxu0 0
    %278 = vmatpush2.bf16.msra.mxu0 0
    %279 = vmatprep.subr.bf16.mxu0 0
    %280 = vmatpush2.bf16.msra.mxu0 0
    %281 = vmatprep.subr.bf16.mxu0 0
    %282 = vmatpush2.bf16.msra.mxu0 0
    %283 = vmatprep.subr.bf16.mxu0 0
    %284 = vmatpush2.bf16.msra.mxu0 0
    %285 = vmatprep.subr.bf16.mxu0 0
    %286 = vmatpush2.bf16.msra.mxu0 0
    %287 = vmatprep.subr.bf16.mxu0 0
    %288 = vmatpush2.bf16.msra.mxu0 0
    %289 = vmatprep.mubr.bf16.mxu0 0
    %290 = vmatmul.mubr.bf16.gmra.mxu0 %v185
    %v291 = vpop.f32.mrf.mxu0
    %v292 = vadd.f32 %v207, %v291
    %v293 = vpop.f32.mrf.mxu0
    %v294 = vpop.f32.mrf.mxu0
    %v295 = vadd.f32 %v207, %v294
    %v296 = vpop.f32.mrf.mxu0
    %297 = vdwg.mxu0
    %v298 = vmax.f32 %v292, 0.0
    %v299 = vmax.f32 %v295, 0.0
    %300 = vst [vmem:[#allocation8] sm:$0xff] %v298
    %301 = vst [vmem:[#allocation8 + $0x8] sm:$0xff] %v299
    // Predicated region
    $region34: #{tpu_custom_call.1} parent=1 // pred_check
      _
    $region35: #{tpu_custom_call.1} parent=1 // pred_check_branch
      %303 = sbr.rel (0) target = $region37
    $region36: #{tpu_custom_call.1} parent=1 // pred_region
      %s305 = ssub.s32 256, 256
      %306 = vsyncadd [#allocation4], %s305
      %s307 = sshll.u32 [#allocation8], 4
      %s308 = int_to_ptr.vmem [resolvable:$true] %s307
      %313 = dma.vmem_to_hbm [thread:$0]  %s308, 256, %s5, [#allocation4], 128, 128, 8
    $region37: #{tpu_custom_call.1} parent=1 // pred_fallthru
      _
    // Predicated region
    $region38: #{tpu_custom_call.1} parent=1 // pred_check
      _
    $region39: #{tpu_custom_call.1} parent=1 // pred_check_branch
      %315 = sbr.rel (0) target = $region41
    $region40: #{tpu_custom_call.1} parent=1 // pred_region
      %316 = dma.done [#allocation4], 256
    $region41: #{tpu_custom_call.1} parent=1 // pred_fallthru
      _
    %317 = vsyncpa [#allocation3], 1
    %318 = vsyncpa [#allocation6], 1
    %319 = vsyncpa [#allocation4], 1

</llo_original>
